<compile_context>
chip_gen: v7x
topology: tpu7x:2x2x1
jax: 0.10.0
libtpu: 0.0.40
codegen_flags: <defaults>
</compile_context>

<pallas_src>
import jax
import jax.numpy as jnp
from jax import lax
from jax.experimental import pallas as pl
from jax.experimental.pallas import tpu as pltpu


_BN_EPS = 1e-5     # PyTorch BatchNorm2d default
_LANE = 128


# ----------------------------- JAX glue ops ---------------------------------
# TODO(synk): farthest_point_sample / query_ball_point / gathers are
# data-dependent (argmax loop, sort, gather) with no clean Pallas tiling; they
# stay in plain JAX.

def _fps(xyz, npoint, key):
    """xyz: [B, N, 3] -> centroid indices [B, npoint] (farthest point sampling)."""
    B, N, _ = xyz.shape
    farthest0 = jax.random.randint(key, (B,), 0, N, dtype=jnp.int32)
    centroids0 = jnp.zeros((B, npoint), dtype=jnp.int32)
    distance0 = jnp.full((B, N), 1e10, dtype=jnp.float32)

    def body(i, carry):
        centroids, distance, farthest = carry
        centroids = centroids.at[:, i].set(farthest)
        centroid = jnp.take_along_axis(xyz, farthest[:, None, None], axis=1)
        dist = jnp.sum((xyz - centroid) ** 2, axis=-1)
        distance = jnp.minimum(distance, dist)
        farthest = jnp.argmax(distance, axis=-1).astype(jnp.int32)
        return centroids, distance, farthest

    centroids, _, _ = lax.fori_loop(0, npoint, body,
                                    (centroids0, distance0, farthest0))
    return centroids


def _index_points(points, idx):
    """points [B,N,C], idx [B,...] int -> [B,...,C]"""
    return jax.vmap(lambda p, i: p[i])(points, idx)


def _square_distance(src, dst):
    dist = -2.0 * jnp.einsum("bnc,bmc->bnm", src, dst)
    dist = dist + jnp.sum(src ** 2, -1)[:, :, None]
    dist = dist + jnp.sum(dst ** 2, -1)[:, None, :]
    return dist


def _query_ball_point(radius, nsample, xyz, new_xyz):
    B, N, _ = xyz.shape
    S = new_xyz.shape[1]
    sqrdists = _square_distance(new_xyz, xyz)              # [B,S,N]
    group_idx = jnp.broadcast_to(jnp.arange(N, dtype=jnp.int32), (B, S, N))
    group_idx = jnp.where(sqrdists > radius ** 2, N, group_idx)
    group_idx = jnp.sort(group_idx, axis=-1)[:, :, :nsample]
    group_first = group_idx[:, :, :1]
    group_idx = jnp.where(group_idx == N, group_first, group_idx)
    return group_idx


# ------------------------------ helpers --------------------------------------

def _round_up(x, m):
    return ((x + m - 1) // m) * m


def _pick_group_tile(num_groups, K, target_rows=1024):
    """Largest divisor g of num_groups with g % 8 == 0 (or g == num_groups) and
       g*K <= target_rows.  Guarantees (8,128)-legal block shapes everywhere."""
    candidates = [g for g in range(1, num_groups + 1)
                  if num_groups % g == 0 and (g % 8 == 0 or g == num_groups)]
    fitting = [g for g in candidates if g * K <= target_rows]
    return max(fitting) if fitting else min(candidates)


def _prepare_weights(weights_f32, first_cin_pad, lane=_LANE):
    """Zero-pad every conv weight to [Cin_pad, Cout_pad] (Cout_pad multiple of
       128 for lane-dense stores) and cast to bf16 for the MXU."""
    padded = []
    cin_pad = first_cin_pad
    for w in weights_f32:
        cin_real, cout_real = w.shape
        cout_pad = _round_up(cout_real, lane)
        wp = jnp.zeros((cin_pad, cout_pad), jnp.float32)
        wp = wp.at[:cin_real, :cout_real].set(w)
        padded.append(wp.astype(jnp.bfloat16))
        cin_pad = cout_pad
    return padded


# --------------------------- Pallas kernels -----------------------------------

def _make_matmul_stats_kernel(first_layer, count, eps):
    """One conv layer over a [tile_rows, Cin] block:
         (optional: normalize+ReLU previous layer's pre-norm activations using
          its global BN stats) -> bf16 matmul -> f32 pre-norm activations
       plus accumulation of per-channel sum / sum-of-squares across the grid
       (VMEM scratch accumulator, grid axis 'arbitrary')."""
    inv_count = 1.0 / float(count)

    def _compute(x_bf16, w_ref, h_ref, stats_ref, acc_ref):
        h = jnp.dot(x_bf16, w_ref[...], preferred_element_type=jnp.float32)
        h_ref[...] = h                                   # lane-dense f32 store
        s = jnp.sum(h, axis=0, keepdims=True)            # [1, Cout]
        sq = jnp.sum(h * h, axis=0, keepdims=True)       # one-pass E[x^2]
        upd = jnp.concatenate(
            [s, sq, jnp.zeros((6, s.shape[1]), jnp.float32)], axis=0)

        @pl.when(pl.program_id(0) == 0)
        def _():
            acc_ref[...] = jnp.zeros_like(acc_ref)

        acc_ref[...] += upd
        stats_ref[...] = acc_ref[...]

    if first_layer:
        def kernel(x_ref, w_ref, h_ref, stats_ref, acc_ref):
            _compute(x_ref[...].astype(jnp.bfloat16),
                     w_ref, h_ref, stats_ref, acc_ref)
    else:
        def kernel(x_ref, sp_ref, w_ref, h_ref, stats_ref, acc_ref):
            sp = sp_ref[...]                              # [8, Cin] f32
            mean = sp[0:1, :] * inv_count
            var = jnp.maximum(sp[1:2, :] * inv_count - mean * mean, 0.0)
            inv = lax.rsqrt(var + eps)
            # BN + ReLU in f32 (v5e-safe); cast only the matmul operand.
            x = jnp.maximum((x_ref[...] - mean) * inv, 0.0)
            _compute(x.astype(jnp.bfloat16), w_ref, h_ref, stats_ref, acc_ref)

    return kernel


def _matmul_stats_layer(x, w, stats_prev, count, tile_rows, eps=_BN_EPS):
    """x: [M, Cin] (bf16 grouped features for layer 0, f32 pre-norm activations
       otherwise); w: [Cin, Cout] bf16; stats_prev: None or [8, Cin] f32.
       Returns (h [M, Cout] f32, stats [8, Cout] f32)."""
    M, Cin = x.shape
    Cout = w.shape[1]
    grid = (M // tile_rows,)
    first = stats_prev is None
    kernel = _make_matmul_stats_kernel(first, count, eps)

    in_specs = [pl.BlockSpec((tile_rows, Cin), lambda i: (i, 0))]
    args = [x]
    if not first:
        in_specs.append(pl.BlockSpec((8, Cin), lambda i: (0, 0)))
        args.append(stats_prev)
    in_specs.append(pl.BlockSpec((Cin, Cout), lambda i: (0, 0)))
    args.append(w)

    flops = 2 * M * Cin * Cout + 4 * M * Cout
    bytes_accessed = (x.size * x.dtype.itemsize + w.size * 2
                      + M * Cout * 4 + 8 * Cout * 4
                      + (0 if first else 8 * Cin * 4))

    return pl.pallas_call(
        kernel,
        grid_spec=pltpu.PrefetchScalarGridSpec(
            num_scalar_prefetch=0,
            grid=grid,
            in_specs=in_specs,
            out_specs=(pl.BlockSpec((tile_rows, Cout), lambda i: (i, 0)),
                       pl.BlockSpec((8, Cout), lambda i: (0, 0))),
            scratch_shapes=[pltpu.VMEM((8, Cout), jnp.float32)]),
        out_shape=(jax.ShapeDtypeStruct((M, Cout), jnp.float32),
                   jax.ShapeDtypeStruct((8, Cout), jnp.float32)),
        compiler_params=pltpu.CompilerParams(
            dimension_semantics=("arbitrary",)),   # stats accumulate over this axis
        cost_estimate=pl.CostEstimate(
            flops=int(flops),
            transcendentals=0 if first else int(Cin),
            bytes_accessed=int(bytes_accessed)),
    )(*args)


def _make_norm_relu_max_kernel(count, eps):
    """Final layer: normalize + ReLU + max over the K (nsample) axis of a
       [tile_g, K, C] block."""
    inv_count = 1.0 / float(count)

    def kernel(h_ref, sp_ref, out_ref):
        sp = sp_ref[...]                                  # [8, C]
        mean = sp[0:1, :] * inv_count
        var = jnp.maximum(sp[1:2, :] * inv_count - mean * mean, 0.0)
        inv = lax.rsqrt(var + eps)
        y = jnp.maximum((h_ref[...] - mean[None]) * inv[None], 0.0)  # [tg,K,C]
        out_ref[...] = jnp.max(y, axis=1)                 # max over nsample

    return kernel


def _norm_relu_max(h, stats, K, count, tile_g, eps=_BN_EPS):
    """h: [M, C] f32 pre-norm activations of the last layer (M = G*K, rows are
       group-major); stats: [8, C]. Returns [G, C] f32."""
    M, C = h.shape
    G = M // K
    h3 = h.reshape(G, K, C)            # row-major reshape: no data movement
    grid = (G // tile_g,)
    kernel = _make_norm_relu_max_kernel(count, eps)

    return pl.pallas_call(
        kernel,
        grid_spec=pltpu.PrefetchScalarGridSpec(
            num_scalar_prefetch=0,
            grid=grid,
            in_specs=[pl.BlockSpec((tile_g, K, C), lambda i: (i, 0, 0)),
                      pl.BlockSpec((8, C), lambda i: (0, 0))],
            out_specs=pl.BlockSpec((tile_g, C), lambda i: (i, 0))),
        out_shape=jax.ShapeDtypeStruct((G, C), jnp.float32),
        compiler_params=pltpu.CompilerParams(
            dimension_semantics=("parallel",)),     # shard over v7x's 2 TCs
        cost_estimate=pl.CostEstimate(
            flops=int(5 * M * C),
            transcendentals=int(C),
            bytes_accessed=int(M * C * 4 + G * C * 4 + 8 * C * 4)),
    )(h3, stats)


def _run_msg_mlp(x0, weights_bf16, K, eps=_BN_EPS):
    """x0: [M, C0_pad] bf16 grouped features (M = B*S*K, group-major rows);
       weights_bf16[j]: [Cin_pad, Cout_pad] bf16. Returns [B*S, Cout_last_pad]."""
    M = x0.shape[0]
    G = M // K
    tile_g = _pick_group_tile(G, K, target_rows=1024)
    tile_rows = tile_g * K
    count = M   # BatchNorm2d batch stats over (B, K, S) per channel

    h, stats = _matmul_stats_layer(x0, weights_bf16[0], None,
                                   count, tile_rows, eps)
    for w in weights_bf16[1:]:
        h, stats = _matmul_stats_layer(h, w, stats, count, tile_rows, eps)
    return _norm_relu_max(h, stats, K, count, tile_g, eps)


# ------------------------------ forward pass ---------------------------------

def pointnet_sa_msg_forward(xyz, points, params, npoint, radius_list,
                            nsample_list, fps_key):
    """
    xyz:    [B, 3, N]   (PyTorch channel-first layout)
    points: [B, D, N] or None
    returns new_xyz [B, 3, S], new_points_concat [B, sum(mlp[-1]), S]
    """
    xyz_t = jnp.transpose(xyz, (0, 2, 1))                       # [B, N, 3]
    points_t = None if points is None else jnp.transpose(points, (0, 2, 1))
    B, N, _ = xyz_t.shape
    S = npoint

    fps_idx = _fps(xyz_t, S, fps_key)                           # [B, S]
    new_xyz = _index_points(xyz_t, fps_idx)                     # [B, S, 3]

    new_points_list = []
    for i, radius in enumerate(radius_list):
        K = nsample_list[i]
        group_idx = _query_ball_point(radius, K, xyz_t, new_xyz)   # [B,S,K]
        grouped_xyz = _index_points(xyz_t, group_idx) - new_xyz[:, :, None, :]
        if points_t is not None:
            grouped_pts = _index_points(points_t, group_idx)       # [B,S,K,D]
            grouped = jnp.concatenate([grouped_pts, grouped_xyz], axis=-1)
        else:
            grouped = grouped_xyz                                  # [B,S,K,C0]

        # Flat [B*S*K, C0] slab: pure reshape, no HBM transpose (review item).
        C0 = grouped.shape[-1]
        C0_pad = _round_up(C0, 8)
        x0 = grouped.reshape(B * S * K, C0)
        if C0_pad != C0:
            x0 = jnp.pad(x0, ((0, 0), (0, C0_pad - C0)))
        x0 = x0.astype(jnp.bfloat16)                   # halve HBM traffic of the
                                                       # biggest array (bf16 MXU)

        weights_f32, _biases_unused = params[i]        # biases cancel vs BN mean
        w_bf16 = _prepare_weights(weights_f32, C0_pad)

        out_pad = _run_msg_mlp(x0, w_bf16, K)          # [B*S, Cout_last_pad] f32
        c_last = weights_f32[-1].shape[1]
        out = out_pad[:, :c_last].reshape(B, S, c_last).transpose(0, 2, 1)
        new_points_list.append(out)                    # [B, c_last, S]

    new_xyz_out = jnp.transpose(new_xyz, (0, 2, 1))    # [B, 3, S]
    new_points_concat = jnp.concatenate(new_points_list, axis=1)
    return new_xyz_out, new_points_concat


def init_params(key, in_channel, mlp_list):
    """Deterministic synthetic weights.  Conv2d(C_in, C_out, 1) is stored as
       W [C_in, C_out] and bias [1, C_out].  (Biases are kept for parity with
       the PyTorch module but are mathematically cancelled by training-mode
       BatchNorm's mean subtraction, so the kernels never load them.)"""
    params = []
    for mlp in mlp_list:
        weights, biases = [], []
        last = in_channel + 3
        for out_c in mlp:
            key, k1, k2 = jax.random.split(key, 3)
            w = jax.random.normal(k1, (last, out_c), jnp.float32) * 0.1
            b = jax.random.normal(k2, (1, out_c), jnp.float32) * 0.01
            weights.append(w)
            biases.append(b)
            last = out_c
        params.append((weights, biases))
    return params


if __name__ == "__main__":
    key = jax.random.PRNGKey(0)
    k_xyz, k_pts, k_par, k_fps = jax.random.split(key, 4)

    B, N, D = 2, 16, 4
    npoint = 8
    radius_list = [0.4, 0.8]
    nsample_list = [4, 8]
    mlp_list = [[8, 16], [8, 32]]   # synchoization == 'BN' (batch-stat norm)

    xyz = jax.random.normal(k_xyz, (B, 3, N), jnp.float32)
    points = jax.random.normal(k_pts, (B, D, N), jnp.float32)
    params = init_params(k_par, D, mlp_list)

    new_xyz, new_points = pointnet_sa_msg_forward(
        xyz, points, params, npoint, radius_list, nsample_list, k_fps)
    jax.block_until_ready((new_xyz, new_points))

    assert new_xyz.shape == (B, 3, npoint)
    assert new_points.shape == (B, sum(m[-1] for m in mlp_list), npoint)
    assert bool(jnp.all(jnp.isfinite(new_points)))
    print("KERNEL_OK")
</pallas_src>

<mosaic_0001>
module attributes {stable_mosaic.version = 11 : i64} {
  func.func @kernel(%arg0: i32, %arg1: memref<64x8xbf16, #tpu.memory_space<vmem>>, %arg2: memref<8x128xbf16, #tpu.memory_space<vmem>>, %arg3: memref<64x128xf32, #tpu.memory_space<vmem>>, %arg4: memref<8x128xf32, #tpu.memory_space<vmem>>, %arg5: memref<8x128xf32, #tpu.memory_space<vmem>>) attributes {dimension_semantics = [#tpu.dimension_semantics<arbitrary>], iteration_bounds = array<i64: 1>, scalar_prefetch = 0 : i64, scratch_operands = 1 : i64, tpu.core_type = #tpu.core_type<tc>, window_params = [{transform_indices = @transform_0, window_bounds = array<i64: 64, 8>}, {pipeline_mode = #tpu.pipeline_mode<synchronous>, transform_indices = @transform_1, window_bounds = array<i64: 8, 128>}, {transform_indices = @transform_2, window_bounds = array<i64: 64, 128>}, {pipeline_mode = #tpu.pipeline_mode<synchronous>, transform_indices = @transform_3, window_bounds = array<i64: 8, 128>}]} {
    %c0 = arith.constant 0 : index
    %c0_0 = arith.constant 0 : index
    %0 = vector.load %arg1[%c0, %c0_0] : memref<64x8xbf16, #tpu.memory_space<vmem>>, vector<64x8xbf16>
    %c0_1 = arith.constant 0 : index
    %c0_2 = arith.constant 0 : index
    %1 = vector.load %arg2[%c0_1, %c0_2] : memref<8x128xbf16, #tpu.memory_space<vmem>>, vector<8x128xbf16>
    %cst = arith.constant dense<0.000000e+00> : vector<64x128xf32>
    %2 = tpu.matmul %0, %1, %cst {dimension_numbers = #tpu.dot_dimension_numbers<[1], [0], [0], [1], [0, 0, 1, 1], [], []>} : vector<64x8xbf16>, vector<8x128xbf16>, vector<64x128xf32> -> vector<64x128xf32>
    %c0_3 = arith.constant 0 : index
    %c0_4 = arith.constant 0 : index
    %3 = vector.load %arg3[%c0_3, %c0_4] : memref<64x128xf32, #tpu.memory_space<vmem>>, vector<64x128xf32>
    tpu.vector_store %arg3[%c0_3, %c0_4], %2 {strides = array<i32>} : memref<64x128xf32, #tpu.memory_space<vmem>>, vector<64x128xf32>,
    %cst_5 = arith.constant dense<0.000000e+00> : vector<128xf32>
    %4 = vector.multi_reduction <add>, %2, %cst_5 [0] : vector<64x128xf32> to vector<128xf32>
    %5 = vector.shape_cast %4 : vector<128xf32> to vector<1x128xf32>
    %6 = arith.mulf %2, %2 : vector<64x128xf32>
    %cst_6 = arith.constant dense<0.000000e+00> : vector<128xf32>
    %7 = vector.multi_reduction <add>, %6, %cst_6 [0] : vector<64x128xf32> to vector<128xf32>
    %8 = vector.shape_cast %7 : vector<128xf32> to vector<1x128xf32>
    %cst_7 = arith.constant 0.000000e+00 : f32
    %9 = vector.broadcast %cst_7 : f32 to vector<6x128xf32>
    %10 = tpu.concatenate %5, %8, %9 in 0 : vector<1x128xf32>, vector<1x128xf32>, vector<6x128xf32> -> vector<8x128xf32>
    %c0_i32 = arith.constant 0 : i32
    %11 = arith.cmpi eq, %arg0, %c0_i32 : i32
    %12 = arith.extui %11 : i1 to i32
    %c0_i32_8 = arith.constant 0 : i32
    %13 = arith.cmpi ne, %12, %c0_i32_8 : i32
    scf.if %13 {
      %cst_17 = arith.constant 0.000000e+00 : f32
      %19 = vector.broadcast %cst_17 : f32 to vector<8x128xf32>
      %c0_18 = arith.constant 0 : index
      %c0_19 = arith.constant 0 : index
      %20 = vector.load %arg5[%c0_18, %c0_19] : memref<8x128xf32, #tpu.memory_space<vmem>>, vector<8x128xf32>
      tpu.vector_store %arg5[%c0_18, %c0_19], %19 {strides = array<i32>} : memref<8x128xf32, #tpu.memory_space<vmem>>, vector<8x128xf32>,
    } else {
    }
    %c0_9 = arith.constant 0 : index
    %c0_10 = arith.constant 0 : index
    %14 = vector.load %arg5[%c0_9, %c0_10] : memref<8x128xf32, #tpu.memory_space<vmem>>, vector<8x128xf32>
    %15 = arith.addf %14, %10 : vector<8x128xf32>
    %c0_11 = arith.constant 0 : index
    %c0_12 = arith.constant 0 : index
    %16 = vector.load %arg5[%c0_11, %c0_12] : memref<8x128xf32, #tpu.memory_space<vmem>>, vector<8x128xf32>
    tpu.vector_store %arg5[%c0_11, %c0_12], %15 {strides = array<i32>} : memref<8x128xf32, #tpu.memory_space<vmem>>, vector<8x128xf32>,
    %c0_13 = arith.constant 0 : index
    %c0_14 = arith.constant 0 : index
    %17 = vector.load %arg5[%c0_13, %c0_14] : memref<8x128xf32, #tpu.memory_space<vmem>>, vector<8x128xf32>
    %c0_15 = arith.constant 0 : index
    %c0_16 = arith.constant 0 : index
    %18 = vector.load %arg4[%c0_15, %c0_16] : memref<8x128xf32, #tpu.memory_space<vmem>>, vector<8x128xf32>
    tpu.vector_store %arg4[%c0_15, %c0_16], %17 {strides = array<i32>} : memref<8x128xf32, #tpu.memory_space<vmem>>, vector<8x128xf32>,
    return
  }
  func.func @transform_0(%arg0: i32) -> (i32, i32) {
    %c0_i32 = arith.constant 0 : i32
    %c0_i32_0 = arith.constant 0 : i32
    return %arg0, %c0_i32 : i32, i32
  }
  func.func @transform_1(%arg0: i32) -> (i32, i32) {
    %c0_i32 = arith.constant 0 : i32
    %c0_i32_0 = arith.constant 0 : i32
    %c0_i32_1 = arith.constant 0 : i32
    return %c0_i32, %c0_i32_0 : i32, i32
  }
  func.func @transform_2(%arg0: i32) -> (i32, i32) {
    %c0_i32 = arith.constant 0 : i32
    %c0_i32_0 = arith.constant 0 : i32
    return %arg0, %c0_i32 : i32, i32
  }
  func.func @transform_3(%arg0: i32) -> (i32, i32) {
    %c0_i32 = arith.constant 0 : i32
    %c0_i32_0 = arith.constant 0 : i32
    %c0_i32_1 = arith.constant 0 : i32
    return %c0_i32, %c0_i32_0 : i32, i32
  }
}

</mosaic_0001>

<llo_original>
// kernel: tpu_custom_call.1
$region0: #{tpu_custom_call.1}
  #allocation0 [shape = 'u32[]', space=smem, size = 0x4, offset = 0x4, fixed_abs, tag = 'smem constant byte address 0x4 - core index']
  #allocation1 [shape = 'u32[144,128]{1,0:T(1,128)}', space=vmem, size = 0x12000, scoped, tag = 'internal scratch']
  #allocation2 [shape = 'f32[8,128]{1,0:T(8,128)}', space=vmem, size = 0x1000, scoped, tag = 'scratch operand']
  %s0 = inlined_call_operand.vmem [shape: bf16[64,8], index: 0, kind: input, shape index: {}]
  %s1 = inlined_call_operand.vmem [shape: bf16[8,128], index: 1, kind: input, shape index: {}]
  %s2 = inlined_call_operand.hbm [shape: f32[64,128], index: 2, kind: output, shape index: {0}]
  %s3 = inlined_call_operand.hbm [shape: f32[8,128], index: 3, kind: output, shape index: {1}]
  %4 = xla_tuple %s2, %s3
  %s5 = sld [smem:[#allocation0]]
  $region30: #{tpu_custom_call.1} parent=0
    _
  %s7 = ssub.s32 1, %s5
  %s8 = scalar_select 0, %s7, %s5
  $region1: #{tpu_custom_call.1} parent=0
    #allocation3 [shape = 'u8[32768]{0}', space=vmem, size = 0x8000, scoped, tag = 'output window, operand 0, single buffered']
    #allocation4 [shape = 's32[1]{0}', space=sflag, size = 0x4, scoped, tag = 'scoped memory for tpu_custom_call.1']
    #allocation5 [shape = 'u8[4096]{0}', space=vmem, size = 0x1000, scoped, tag = 'output window, operand 1, single buffered']
    #allocation6 [shape = 's32[1]{0}', space=sflag, size = 0x4, scoped, tag = 'scoped memory for tpu_custom_call.1']
    %9 = vsyncpa [#allocation4], 0
    %10 = vsyncpa [#allocation6], 0
    // Predicated region
    $region2: #{tpu_custom_call.1} parent=1 // pred_check
      _
    $region3: #{tpu_custom_call.1} parent=1 // pred_check_branch
      %12 = sbr.rel (0) target = $region5
    $region4: #{tpu_custom_call.1} parent=1 // pred_region
      _
    $region5: #{tpu_custom_call.1} parent=1 // pred_fallthru
      _
    // Predicated region
    $region6: #{tpu_custom_call.1} parent=1 // pred_check
      _
    $region7: #{tpu_custom_call.1} parent=1 // pred_check_branch
      %14 = sbr.rel (0) target = $region9
    $region8: #{tpu_custom_call.1} parent=1 // pred_region
      _
    $region9: #{tpu_custom_call.1} parent=1 // pred_fallthru
      _
    %v16 = vld [vmem:[%s0] sm:$0xf]
    %v17 = vld [vmem:[%s0 + $0x4] sm:$0xf]
    %v18 = vld [vmem:[%s0 + $0x8] sm:$0xf]
    %v19 = vld [vmem:[%s0 + $0xc] sm:$0xf]
    %v20 = vld [vmem:[%s0 + $0x10] sm:$0xf]
    %v21 = vld [vmem:[%s0 + $0x14] sm:$0xf]
    %v22 = vld [vmem:[%s0 + $0x18] sm:$0xf]
    %v23 = vld [vmem:[%s0 + $0x1c] sm:$0xf]
    %v24 = vld [vmem:[%s1] sm:$0xf]
    %v33 = vunpack.c.l.b16 %v16
    %v34 = vunpack.c.l.b16 %v17
    %v35 = vunpack.c.l.b16 %v18
    %v36 = vunpack.c.l.b16 %v19
    %v37 = vunpack.c.l.b16 %v20
    %v38 = vunpack.c.l.b16 %v21
    %v39 = vunpack.c.l.b16 %v22
    %v40 = vunpack.c.l.b16 %v23
    %v41 = vpack.c.b16 %v34, %v33
    %v42 = vpack.c.b16 %v36, %v35
    %v43 = vpack.c.b16 %v38, %v37
    %v44 = vpack.c.b16 %v40, %v39
    %vm45 = vcmask 64512
    %v47 = vsel %vm45, %v41, 0
    %v50 = vsel %vm45, %v42, 0
    %v53 = vsel %vm45, %v43, 0
    %v56 = vsel %vm45, %v44, 0
    %vm58 = vcmask 1043456
    %v60 = vsel %vm58, %v24, 0
    %62 = vmatprep.subr.bf16.mxu0 0
    %63 = vmatpush1.bf16.msra.mxu0 %v60
    %64 = vmatprep.subr.bf16.mxu0 0
    %65 = vmatpush1.bf16.msra.mxu0 0
    %66 = vmatprep.subr.bf16.mxu0 0
    %67 = vmatpush1.bf16.msra.mxu0 0
    %68 = vmatprep.subr.bf16.mxu0 0
    %69 = vmatpush1.bf16.msra.mxu0 0
    %70 = vmatprep.subr.bf16.mxu0 0
    %71 = vmatpush1.bf16.msra.mxu0 0
    %72 = vmatprep.subr.bf16.mxu0 0
    %73 = vmatpush1.bf16.msra.mxu0 0
    %74 = vmatprep.subr.bf16.mxu0 0
    %75 = vmatpush1.bf16.msra.mxu0 0
    %76 = vmatprep.subr.bf16.mxu0 0
    %77 = vmatpush1.bf16.msra.mxu0 0
    %78 = vmatprep.subr.bf16.mxu0 0
    %79 = vmatpush1.bf16.msra.mxu0 0
    %80 = vmatprep.subr.bf16.mxu0 0
    %81 = vmatpush1.bf16.msra.mxu0 0
    %82 = vmatprep.subr.bf16.mxu0 0
    %83 = vmatpush1.bf16.msra.mxu0 0
    %84 = vmatprep.subr.bf16.mxu0 0
    %85 = vmatpush1.bf16.msra.mxu0 0
    %86 = vmatprep.subr.bf16.mxu0 0
    %87 = vmatpush1.bf16.msra.mxu0 0
    %88 = vmatprep.subr.bf16.mxu0 0
    %89 = vmatpush1.bf16.msra.mxu0 0
    %90 = vmatprep.subr.bf16.mxu0 0
    %91 = vmatpush1.bf16.msra.mxu0 0
    %92 = vmatprep.subr.bf16.mxu0 0
    %93 = vmatpush1.bf16.msra.mxu0 0
    %94 = vmatprep.mubr.bf16.mxu0 0
    %95 = vmatmul.mubr.bf16.gmra.mrb[0].mxu0 %v47
    %v96 = vpop.f32.mrb[0].mxu0
    %v97 = vadd.f32 0.0, %v96
    %v98 = vpop.f32.mrb[0].mxu0
    %v99 = vpop.f32.mrb[0].mxu0
    %v100 = vadd.f32 0.0, %v99
    %v101 = vpop.f32.mrb[0].mxu0
    %102 = vmatprep.mubr.bf16.mxu0 0
    %103 = vmatmul.mubr.bf16.gmra.mrb[0].mxu0 %v50
    %v104 = vpop.f32.mrb[0].mxu0
    %v105 = vadd.f32 0.0, %v104
    %v106 = vpop.f32.mrb[0].mxu0
    %v107 = vpop.f32.mrb[0].mxu0
    %v108 = vadd.f32 0.0, %v107
    %v109 = vpop.f32.mrb[0].mxu0
    %110 = vmatprep.mubr.bf16.mxu0 0
    %111 = vmatmul.mubr.bf16.gmra.mrb[0].mxu0 %v53
    %v112 = vpop.f32.mrb[0].mxu0
    %v113 = vadd.f32 0.0, %v112
    %v114 = vpop.f32.mrb[0].mxu0
    %v115 = vpop.f32.mrb[0].mxu0
    %v116 = vadd.f32 0.0, %v115
    %v117 = vpop.f32.mrb[0].mxu0
    %118 = vmatprep.mubr.bf16.mxu0 0
    %119 = vmatmul.mubr.bf16.gmra.mrb[0].mxu0 %v56
    %v120 = vpop.f32.mrb[0].mxu0
    %v121 = vadd.f32 0.0, %v120
    %v122 = vpop.f32.mrb[0].mxu0
    %v123 = vpop.f32.mrb[0].mxu0
    %v124 = vadd.f32 0.0, %v123
    %v125 = vpop.f32.mrb[0].mxu0
    %126 = vdwg.mxu0
    %127 = vst [vmem:[#allocation3] sm:$0xff] %v97
    %128 = vst [vmem:[#allocation3 + $0x8] sm:$0xff] %v100
    %129 = vst [vmem:[#allocation3 + $0x10] sm:$0xff] %v105
    %130 = vst [vmem:[#allocation3 + $0x18] sm:$0xff] %v108
    %131 = vst [vmem:[#allocation3 + $0x20] sm:$0xff] %v113
    %132 = vst [vmem:[#allocation3 + $0x28] sm:$0xff] %v116
    %133 = vst [vmem:[#allocation3 + $0x30] sm:$0xff] %v121
    %134 = vst [vmem:[#allocation3 + $0x38] sm:$0xff] %v124
    %v135 = vadd.f32 %v97, %v100
    %v136 = vadd.f32 %v135, %v105
    %v137 = vadd.f32 %v136, %v108
    %v138 = vadd.f32 %v137, %v113
    %v139 = vadd.f32 %v138, %v116
    %v140 = vadd.f32 %v139, %v121
    %v141 = vadd.f32 %v140, %v124
    %v142 = vrot.slane %v141, 4
    %v143 = vadd.f32 %v141, %v142
    %v144 = vrot.slane %v143, 2
    %v145 = vadd.f32 %v143, %v144
    %v146 = vrot.slane %v145, 1
    %v147 = vadd.f32 %v145, %v146
    %v148 = vmul.f32 %v97, %v97
    %v149 = vmul.f32 %v100, %v100
    %v150 = vmul.f32 %v105, %v105
    %v151 = vmul.f32 %v108, %v108
    %v152 = vmul.f32 %v113, %v113
    %v153 = vmul.f32 %v116, %v116
    %v154 = vmul.f32 %v121, %v121
    %v155 = vmul.f32 %v124, %v124
    %v156 = vadd.f32 %v148, %v149
    %v157 = vadd.f32 %v156, %v150
    %v158 = vadd.f32 %v157, %v151
    %v159 = vadd.f32 %v158, %v152
    %v160 = vadd.f32 %v159, %v153
    %v161 = vadd.f32 %v160, %v154
    %v162 = vadd.f32 %v161, %v155
    %v163 = vrot.slane %v162, 4
    %v164 = vadd.f32 %v162, %v163
    %v165 = vrot.slane %v164, 2
    %v166 = vadd.f32 %v164, %v165
    %v167 = vrot.slane %v166, 1
    %v168 = vadd.f32 %v166, %v167
    %vm169 = vcmask 1040384
    %v170 = vsel %vm169, %v147, %v168
    %vm171 = vcmask 1041408
    %v172 = vsel %vm171, %v170, 0.0
    %p173 = scmp.eq.s32.totalorder 0, 0
    // Predicated region
    $region10: #{tpu_custom_call.1} parent=1 // pred_check
      %p174 = pneg %p173
    $region11: #{tpu_custom_call.1} parent=1 // pred_check_branch
      %176 = sbr.rel (%p174) target = $region13
    $region12: #{tpu_custom_call.1} parent=1 // pred_region
      %177 = vst [vmem:[#allocation2] sm:$0xff] 0.0
    $region13: #{tpu_custom_call.1} parent=1 // pred_fallthru
      _
    %v178 = vld [vmem:[#allocation2] sm:$0xff]
    %v179 = vadd.f32 %v178, %v172
    %180 = vst [vmem:[#allocation2] sm:$0xff] %v179
    %v181 = vld [vmem:[#allocation2] sm:$0xff]
    %182 = vst [vmem:[#allocation5] sm:$0xff] %v181
    // Predicated region
    $region14: #{tpu_custom_call.1} parent=1 // pred_check
      _
    $region15: #{tpu_custom_call.1} parent=1 // pred_check_branch
      %184 = sbr.rel (0) target = $region17
    $region16: #{tpu_custom_call.1} parent=1 // pred_region
      %s186 = ssub.s32 1024, 1024
      %187 = vsyncadd [#allocation4], %s186
      %s188 = sshll.u32 [#allocation3], 4
      %s189 = int_to_ptr.vmem [resolvable:$true] %s188
      %194 = dma.vmem_to_hbm [thread:$0]  %s189, 1024, %s2, [#allocation4], 128, 128, 8
    $region17: #{tpu_custom_call.1} parent=1 // pred_fallthru
      _
    // Predicated region
    $region18: #{tpu_custom_call.1} parent=1 // pred_check
      _
    $region19: #{tpu_custom_call.1} parent=1 // pred_check_branch
      %196 = sbr.rel (0) target = $region21
    $region20: #{tpu_custom_call.1} parent=1 // pred_region
      %s198 = ssub.s32 128, 128
      %199 = vsyncadd [#allocation6], %s198
      %s201 = sshll.u32 [#allocation5], 4
      %s202 = int_to_ptr.vmem [resolvable:$true] %s201
      %204 = dma.vmem_to_hbm [thread:$0]  %s202, 128, %s3, [#allocation6]
    $region21: #{tpu_custom_call.1} parent=1 // pred_fallthru
      _
    // Predicated region
    $region22: #{tpu_custom_call.1} parent=1 // pred_check
      _
    $region23: #{tpu_custom_call.1} parent=1 // pred_check_branch
      %206 = sbr.rel (0) target = $region25
    $region24: #{tpu_custom_call.1} parent=1 // pred_region
      %207 = dma.done [#allocation4], 1024
    $region25: #{tpu_custom_call.1} parent=1 // pred_fallthru
      _
    // Predicated region
    $region26: #{tpu_custom_call.1} parent=1 // pred_check
      _
    $region27: #{tpu_custom_call.1} parent=1 // pred_check_branch
      %209 = sbr.rel (0) target = $region29
    $region28: #{tpu_custom_call.1} parent=1 // pred_region
      %210 = dma.done [#allocation6], 128
    $region29: #{tpu_custom_call.1} parent=1 // pred_fallthru
      _
    %211 = vsyncpa [#allocation4], 1
    %212 = vsyncpa [#allocation6], 1

</llo_original>
